<compile_context>
chip_gen: v7x
topology: tpu7x:2x2x1
jax: 0.10.0
libtpu: 0.0.40
codegen_flags: <defaults>
</compile_context>

<pallas_src>
import functools

import jax
import jax.numpy as jnp
from jax.experimental import pallas as pl
from jax.experimental.pallas import tpu as pltpu


def _round_up(x, m):
    return ((x + m - 1) // m) * m


def _skipgram_tile_kernel(w_ref, ctx_ref, out_ref, *,
                          num_ctx, valid_b, tile_b, num_tiles):
    """One batch tile of the skip-gram NEG loss (batch on lanes).

    w_ref   : (D, tile_b)            f32 center embeddings
    ctx_ref : (num_ctx, D, tile_b)   f32 context slots (slot 0 = -positive ctx)
    out_ref : (1, 8, 128)            f32 per-tile partial loss (broadcast scalar)
    """
    w = w_ref[...]                                        # (D, tile_b)

    # Per-slot scores: reduce over D (sublane axis) -> (1, tile_b); pack all
    # K+1 rows into one sublane-dense tensor so the transcendental chain below
    # runs once on packed vregs instead of 6 narrow chains.
    rows = [jnp.sum(ctx_ref[k] * w, axis=0, keepdims=True)
            for k in range(num_ctx)]
    scores = jnp.concatenate(rows, axis=0)                # (num_ctx, tile_b)
    scores = jnp.clip(scores, -10.0, 10.0)
    # Uniform formula for every slot (positive context was pre-negated in the
    # wrapper):  -logsigmoid(x) == log1p(exp(-x)),  clip(-x) == -clip(x).
    per_pair = jnp.log1p(jnp.exp(scores))                 # (num_ctx, tile_b)

    def _store(total):
        out_ref[...] = jnp.full(out_ref.shape, total, dtype=out_ref.dtype)

    if valid_b == num_tiles * tile_b:
        # Batch is tile-aligned: no mask code anywhere.
        _store(jnp.sum(per_pair))
    else:
        last = num_tiles - 1

        @pl.when(pl.program_id(0) != last)
        def _():                                          # full tiles: fast path
            _store(jnp.sum(per_pair))

        @pl.when(pl.program_id(0) == last)
        def _():                                          # ragged last tile
            col = jax.lax.broadcasted_iota(jnp.int32, per_pair.shape, 1)
            valid = (col + last * tile_b) < valid_b
            _store(jnp.sum(jnp.where(valid, per_pair, 0.0)))


def skipgram_loss_pallas(w_weight, v_weight, pos_w, pos_v, neg_v, *,
                         tile_b=8192):
    """Full forward: embedding lookups (XLA) + tiled lane-dense Pallas loss."""
    B = int(pos_w.shape[0])
    K = int(neg_v.shape[1])
    D = int(w_weight.shape[1])

    # --- tile sizing: batch is the lane axis -> multiples of 128 -------------
    tile_b = min(_round_up(tile_b, 128), _round_up(B, 128))
    if _round_up(B, 128) >= 256:
        # Keep >= 2 tiles so the "parallel" grid axis can shard across the two
        # TensorCores of a v7x megacore.
        tile_b = min(tile_b, _round_up(-(-B // 2), 128))
    tile_b = max(128, tile_b)
    b_pad = _round_up(B, tile_b)
    num_tiles = b_pad // tile_b
    pad = b_pad - B

    # --- embedding gathers (XLA fused gather), then lane-dense layout --------
    # TODO(synk): fuse the gathers into the kernel (VMEM-resident tables +
    # scalar-prefetched indices) and/or use bf16 tables to halve HBM bytes.
    emb_w = jnp.take(w_weight, pos_w, axis=0)             # (B, D)
    emb_v = jnp.take(v_weight, pos_v, axis=0)             # (B, D)
    neg_emb = jnp.take(v_weight, neg_v, axis=0)           # (B, K, D)

    # Slot 0 carries the negated positive context so the kernel applies the
    # same log1p(exp(clip(.))) to every slot.
    ctx = jnp.concatenate([-emb_v[:, None, :], neg_emb], axis=1)   # (B, K+1, D)

    w_t = jnp.pad(emb_w.T, ((0, 0), (0, pad)))                     # (D, b_pad)
    ctx_t = jnp.pad(jnp.transpose(ctx, (1, 2, 0)),
                    ((0, 0), (0, 0), (0, pad)))                    # (K+1, D, b_pad)

    kernel = functools.partial(
        _skipgram_tile_kernel,
        num_ctx=K + 1, valid_b=B, tile_b=tile_b, num_tiles=num_tiles)

    # Advisory cost estimate: lets XLA overlap the gathers/pads with the kernel.
    cost = pl.CostEstimate(
        flops=2 * (K + 1) * b_pad * D + 4 * (K + 1) * b_pad,
        transcendentals=2 * (K + 1) * b_pad,
        bytes_accessed=(K + 2) * b_pad * D * 4 + num_tiles * 8 * 128 * 4,
    )
    # VMEM budget: double-buffered input tiles + intermediates + headroom.
    bytes_per_step = (K + 2) * D * tile_b * 4
    vmem_limit = int(min(max(4 * bytes_per_step, 16 << 20), 40 << 20))

    partials = pl.pallas_call(
        kernel,
        grid=(num_tiles,),
        in_specs=[
            pl.BlockSpec((D, tile_b), lambda i: (0, i)),
            pl.BlockSpec((K + 1, D, tile_b), lambda i: (0, 0, i)),
        ],
        out_specs=pl.BlockSpec((1, 8, 128), lambda i: (i, 0, 0)),
        out_shape=jax.ShapeDtypeStruct((num_tiles, 8, 128), jnp.float32),
        compiler_params=pltpu.CompilerParams(
            dimension_semantics=("parallel",),    # megacore sharding on v7x
            vmem_limit_bytes=vmem_limit),
        cost_estimate=cost,
    )(w_t, ctx_t)

    return jnp.sum(partials[:, 0, 0])


def skipgram_loss_ref(w_weight, v_weight, pos_w, pos_v, neg_v):
    """Pure-JAX reference matching the PyTorch forward exactly."""
    emb_w = jnp.take(w_weight, pos_w, axis=0)
    emb_v = jnp.take(v_weight, pos_v, axis=0)
    neg_emb_v = jnp.take(v_weight, neg_v, axis=0)
    score = jnp.sum(emb_w * emb_v, axis=1)
    score = jnp.clip(score, -10.0, 10.0)
    score = jax.nn.log_sigmoid(score)
    neg_score = jnp.einsum("bkd,bd->bk", neg_emb_v, emb_w)
    neg_score = jnp.clip(neg_score, -10.0, 10.0)
    neg_score = jax.nn.log_sigmoid(-neg_score)
    return -jnp.sum(score) - jnp.sum(neg_score)


class SkipGramModelJAX:
    """Deterministic re-implementation of SkipGramModel.forward."""

    def __init__(self, vocab_size, embed_size, key):
        self.vocab_size = vocab_size
        self.embed_size = embed_size
        initrange = 0.5 / embed_size
        # w_embeddings ~ U(-initrange, initrange); v_embeddings init to 0.
        self.w_weight = jax.random.uniform(
            key, (vocab_size, embed_size), jnp.float32,
            minval=-initrange, maxval=initrange)
        self.v_weight = jnp.zeros((vocab_size, embed_size), jnp.float32)

    def forward(self, pos_w, pos_v, neg_v):
        return skipgram_loss_pallas(
            self.w_weight, self.v_weight, pos_w, pos_v, neg_v)

    def forward_ref(self, pos_w, pos_v, neg_v):
        return skipgram_loss_ref(
            self.w_weight, self.v_weight, pos_w, pos_v, neg_v)


if __name__ == "__main__":
    vocab_size = 50
    embed_size = 32
    batch = 8
    num_neg = 5

    key = jax.random.PRNGKey(0)
    k_emb, k_pw, k_pv, k_nv, k_w2, k_v2, k_pw2, k_pv2, k_nv2 = (
        jax.random.split(key, 9))

    # --- check 1: exact module semantics (v_embeddings initialized to 0) ----
    model = SkipGramModelJAX(vocab_size, embed_size, k_emb)
    pos_w = jax.random.randint(k_pw, (batch,), 0, vocab_size)            # (B,)
    pos_v = jax.random.randint(k_pv, (batch,), 0, vocab_size)            # (B,)
    neg_v = jax.random.randint(k_nv, (batch, num_neg), 0, vocab_size)    # (B, K)

    loss = model.forward(pos_w, pos_v, neg_v)
    jax.block_until_ready(loss)
    loss_ref = model.forward_ref(pos_w, pos_v, neg_v)
    jax.block_until_ready(loss_ref)
    assert jnp.allclose(loss, loss_ref, rtol=1e-4, atol=1e-4), (loss, loss_ref)

    # --- check 2: random tables, multi-tile grid (exercises the masked last
    # tile and the "parallel" multi-tile path) -------------------------------
    batch2 = 300
    w_tab = jax.random.uniform(k_w2, (vocab_size, embed_size), jnp.float32,
                               minval=-1.0, maxval=1.0)
    v_tab = jax.random.uniform(k_v2, (vocab_size, embed_size), jnp.float32,
                               minval=-1.0, maxval=1.0)
    pos_w2 = jax.random.randint(k_pw2, (batch2,), 0, vocab_size)
    pos_v2 = jax.random.randint(k_pv2, (batch2,), 0, vocab_size)
    neg_v2 = jax.random.randint(k_nv2, (batch2, num_neg), 0, vocab_size)

    loss2 = skipgram_loss_pallas(w_tab, v_tab, pos_w2, pos_v2, neg_v2)
    jax.block_until_ready(loss2)
    loss2_ref = skipgram_loss_ref(w_tab, v_tab, pos_w2, pos_v2, neg_v2)
    jax.block_until_ready(loss2_ref)
    assert jnp.allclose(loss2, loss2_ref, rtol=1e-4, atol=1e-4), (loss2, loss2_ref)

    print("KERNEL_OK")
</pallas_src>

<mosaic_0001>
module attributes {stable_mosaic.version = 11 : i64} {
  func.func @_skipgram_tile_kernel(%arg0: i32, %arg1: memref<32x128xf32, #tpu.memory_space<vmem>>, %arg2: memref<6x32x128xf32, #tpu.memory_space<vmem>>, %arg3: memref<1x8x128xf32, #tpu.memory_space<vmem>>) attributes {dimension_semantics = [#tpu.dimension_semantics<parallel>], iteration_bounds = array<i64: 1>, scalar_prefetch = 0 : i64, scratch_operands = 0 : i64, tpu.core_type = #tpu.core_type<tc>, window_params = [{transform_indices = @transform_0, window_bounds = array<i64: 32, 128>}, {transform_indices = @transform_1, window_bounds = array<i64: 6, 32, 128>}, {transform_indices = @transform_2, window_bounds = array<i64: 1, 8, 128>}]} {
    %c0 = arith.constant 0 : index
    %c0_0 = arith.constant 0 : index
    %0 = vector.load %arg1[%c0, %c0_0] : memref<32x128xf32, #tpu.memory_space<vmem>>, vector<32x128xf32>
    %c0_1 = arith.constant 0 : index
    %c0_2 = arith.constant 0 : index
    %c0_3 = arith.constant 0 : index
    %1 = vector.load %arg2[%c0_1, %c0_2, %c0_3] : memref<6x32x128xf32, #tpu.memory_space<vmem>>, vector<1x32x128xf32>
    %2 = vector.shape_cast %1 : vector<1x32x128xf32> to vector<32x128xf32>
    %3 = arith.mulf %2, %0 : vector<32x128xf32>
    %cst = arith.constant dense<0.000000e+00> : vector<128xf32>
    %4 = vector.multi_reduction <add>, %3, %cst [0] : vector<32x128xf32> to vector<128xf32>
    %5 = vector.shape_cast %4 : vector<128xf32> to vector<1x128xf32>
    %c1 = arith.constant 1 : index
    %c0_4 = arith.constant 0 : index
    %c0_5 = arith.constant 0 : index
    %6 = vector.load %arg2[%c1, %c0_4, %c0_5] : memref<6x32x128xf32, #tpu.memory_space<vmem>>, vector<1x32x128xf32>
    %7 = vector.shape_cast %6 : vector<1x32x128xf32> to vector<32x128xf32>
    %8 = arith.mulf %7, %0 : vector<32x128xf32>
    %cst_6 = arith.constant dense<0.000000e+00> : vector<128xf32>
    %9 = vector.multi_reduction <add>, %8, %cst_6 [0] : vector<32x128xf32> to vector<128xf32>
    %10 = vector.shape_cast %9 : vector<128xf32> to vector<1x128xf32>
    %c2 = arith.constant 2 : index
    %c0_7 = arith.constant 0 : index
    %c0_8 = arith.constant 0 : index
    %11 = vector.load %arg2[%c2, %c0_7, %c0_8] : memref<6x32x128xf32, #tpu.memory_space<vmem>>, vector<1x32x128xf32>
    %12 = vector.shape_cast %11 : vector<1x32x128xf32> to vector<32x128xf32>
    %13 = arith.mulf %12, %0 : vector<32x128xf32>
    %cst_9 = arith.constant dense<0.000000e+00> : vector<128xf32>
    %14 = vector.multi_reduction <add>, %13, %cst_9 [0] : vector<32x128xf32> to vector<128xf32>
    %15 = vector.shape_cast %14 : vector<128xf32> to vector<1x128xf32>
    %c3 = arith.constant 3 : index
    %c0_10 = arith.constant 0 : index
    %c0_11 = arith.constant 0 : index
    %16 = vector.load %arg2[%c3, %c0_10, %c0_11] : memref<6x32x128xf32, #tpu.memory_space<vmem>>, vector<1x32x128xf32>
    %17 = vector.shape_cast %16 : vector<1x32x128xf32> to vector<32x128xf32>
    %18 = arith.mulf %17, %0 : vector<32x128xf32>
    %cst_12 = arith.constant dense<0.000000e+00> : vector<128xf32>
    %19 = vector.multi_reduction <add>, %18, %cst_12 [0] : vector<32x128xf32> to vector<128xf32>
    %20 = vector.shape_cast %19 : vector<128xf32> to vector<1x128xf32>
    %c4 = arith.constant 4 : index
    %c0_13 = arith.constant 0 : index
    %c0_14 = arith.constant 0 : index
    %21 = vector.load %arg2[%c4, %c0_13, %c0_14] : memref<6x32x128xf32, #tpu.memory_space<vmem>>, vector<1x32x128xf32>
    %22 = vector.shape_cast %21 : vector<1x32x128xf32> to vector<32x128xf32>
    %23 = arith.mulf %22, %0 : vector<32x128xf32>
    %cst_15 = arith.constant dense<0.000000e+00> : vector<128xf32>
    %24 = vector.multi_reduction <add>, %23, %cst_15 [0] : vector<32x128xf32> to vector<128xf32>
    %25 = vector.shape_cast %24 : vector<128xf32> to vector<1x128xf32>
    %c5 = arith.constant 5 : index
    %c0_16 = arith.constant 0 : index
    %c0_17 = arith.constant 0 : index
    %26 = vector.load %arg2[%c5, %c0_16, %c0_17] : memref<6x32x128xf32, #tpu.memory_space<vmem>>, vector<1x32x128xf32>
    %27 = vector.shape_cast %26 : vector<1x32x128xf32> to vector<32x128xf32>
    %28 = arith.mulf %27, %0 : vector<32x128xf32>
    %cst_18 = arith.constant dense<0.000000e+00> : vector<128xf32>
    %29 = vector.multi_reduction <add>, %28, %cst_18 [0] : vector<32x128xf32> to vector<128xf32>
    %30 = vector.shape_cast %29 : vector<128xf32> to vector<1x128xf32>
    %31 = tpu.concatenate %5, %10, %15, %20, %25, %30 in 0 : vector<1x128xf32>, vector<1x128xf32>, vector<1x128xf32>, vector<1x128xf32>, vector<1x128xf32>, vector<1x128xf32> -> vector<6x128xf32>
    %cst_19 = arith.constant -1.000000e+01 : f32
    %cst_20 = arith.constant 1.000000e+01 : f32
    %32 = vector.broadcast %cst_19 : f32 to vector<6x128xf32>
    %33 = arith.maximumf %32, %31 : vector<6x128xf32>
    %34 = vector.broadcast %cst_20 : f32 to vector<6x128xf32>
    %35 = arith.minimumf %34, %33 : vector<6x128xf32>
    %36 = math.exp %35 : vector<6x128xf32>
    %37 = math.log1p %36 : vector<6x128xf32>
    %c0_i32 = arith.constant 0 : i32
    %38 = arith.cmpi ne, %arg0, %c0_i32 : i32
    %39 = arith.extui %38 : i1 to i32
    %c0_i32_21 = arith.constant 0 : i32
    %40 = arith.cmpi ne, %39, %c0_i32_21 : i32
    scf.if %40 {
      %44 = vector.shape_cast %37 : vector<6x128xf32> to vector<1x6x128xf32>
      %cst_24 = arith.constant dense<0.000000e+00> : vector<1xf32>
      %45 = vector.multi_reduction <add>, %44, %cst_24 [1, 2] : vector<1x6x128xf32> to vector<1xf32>
      %46 = vector.shape_cast %45 : vector<1xf32> to vector<1x1x1xf32>
      %47 = vector.extract %46[0, 0, 0] : f32 from vector<1x1x1xf32>
      %48 = vector.broadcast %47 : f32 to vector<1x8x128xf32>
      %c0_25 = arith.constant 0 : index
      %c0_26 = arith.constant 0 : index
      %c0_27 = arith.constant 0 : index
      %49 = vector.load %arg3[%c0_25, %c0_26, %c0_27] : memref<1x8x128xf32, #tpu.memory_space<vmem>>, vector<1x8x128xf32>
      tpu.vector_store %arg3[%c0_25, %c0_26, %c0_27], %48 {strides = array<i32>} : memref<1x8x128xf32, #tpu.memory_space<vmem>>, vector<1x8x128xf32>,
    } else {
    }
    %c0_i32_22 = arith.constant 0 : i32
    %41 = arith.cmpi eq, %arg0, %c0_i32_22 : i32
    %42 = arith.extui %41 : i1 to i32
    %c0_i32_23 = arith.constant 0 : i32
    %43 = arith.cmpi ne, %42, %c0_i32_23 : i32
    scf.if %43 {
      %44 = tpu.iota {dimensions = array<i32: 1>} : vector<6x128xi32>
      %c0_i32_24 = arith.constant 0 : i32
      %45 = vector.broadcast %c0_i32_24 : i32 to vector<6x128xi32>
      %46 = arith.addi %44, %45 : vector<6x128xi32>
      %c8_i32 = arith.constant 8 : i32
      %47 = vector.broadcast %c8_i32 : i32 to vector<6x128xi32>
      %48 = arith.cmpi slt, %46, %47 : vector<6x128xi32>
      %cst_25 = arith.constant 0.000000e+00 : f32
      %49 = vector.broadcast %cst_25 : f32 to vector<6x128xf32>
      %50 = arith.select %48, %37, %49 : vector<6x128xi1>, vector<6x128xf32>
      %51 = vector.shape_cast %50 : vector<6x128xf32> to vector<1x6x128xf32>
      %cst_26 = arith.constant dense<0.000000e+00> : vector<1xf32>
      %52 = vector.multi_reduction <add>, %51, %cst_26 [1, 2] : vector<1x6x128xf32> to vector<1xf32>
      %53 = vector.shape_cast %52 : vector<1xf32> to vector<1x1x1xf32>
      %54 = vector.extract %53[0, 0, 0] : f32 from vector<1x1x1xf32>
      %55 = vector.broadcast %54 : f32 to vector<1x8x128xf32>
      %c0_27 = arith.constant 0 : index
      %c0_28 = arith.constant 0 : index
      %c0_29 = arith.constant 0 : index
      %56 = vector.load %arg3[%c0_27, %c0_28, %c0_29] : memref<1x8x128xf32, #tpu.memory_space<vmem>>, vector<1x8x128xf32>
      tpu.vector_store %arg3[%c0_27, %c0_28, %c0_29], %55 {strides = array<i32>} : memref<1x8x128xf32, #tpu.memory_space<vmem>>, vector<1x8x128xf32>,
    } else {
    }
    return
  }
  func.func @transform_0(%arg0: i32) -> (i32, i32) {
    %c0_i32 = arith.constant 0 : i32
    %c0_i32_0 = arith.constant 0 : i32
    return %c0_i32, %arg0 : i32, i32
  }
  func.func @transform_1(%arg0: i32) -> (i32, i32, i32) {
    %c0_i32 = arith.constant 0 : i32
    %c0_i32_0 = arith.constant 0 : i32
    %c0_i32_1 = arith.constant 0 : i32
    return %c0_i32, %c0_i32_0, %arg0 : i32, i32, i32
  }
  func.func @transform_2(%arg0: i32) -> (i32, i32, i32) {
    %c0_i32 = arith.constant 0 : i32
    %c0_i32_0 = arith.constant 0 : i32
    %c0_i32_1 = arith.constant 0 : i32
    return %arg0, %c0_i32, %c0_i32_0 : i32, i32, i32
  }
}

</mosaic_0001>

<llo_original>
// kernel: tpu_custom_call.1
$region0: #{tpu_custom_call.1}
  #allocation0 [shape = 'u32[]', space=smem, size = 0x4, offset = 0x4, fixed_abs, tag = 'smem constant byte address 0x4 - core index']
  #allocation1 [shape = 'u32[144,128]{1,0:T(1,128)}', space=vmem, size = 0x12000, scoped, tag = 'internal scratch']
  %s0 = inlined_call_operand.hbm [shape: f32[32,128], index: 0, kind: input, shape index: {}]
  %s1 = inlined_call_operand.hbm [shape: f32[6,32,128], index: 1, kind: input, shape index: {}]
  %s2 = inlined_call_operand.hbm [shape: f32[1,8,128], index: 2, kind: output, shape index: {}]
  %s3 = sld [smem:[#allocation0]]
  $region34: #{tpu_custom_call.1} parent=0
    _
  %s5 = ssub.s32 1, %s3
  %s6 = scalar_select 0, %s5, %s3
  $region1: #{tpu_custom_call.1} parent=0
    #allocation2 [shape = 'u8[16384]{0}', space=vmem, size = 0x4000, scoped, tag = 'input window, operand 0, single buffered']
    #allocation3 [shape = 's32[1]{0}', space=sflag, size = 0x4, scoped, tag = 'scoped memory for tpu_custom_call.1']
    #allocation4 [shape = 's32[1]{0}', space=sflag, size = 0x4, scoped, tag = 'scoped memory for tpu_custom_call.1']
    #allocation5 [shape = 'u8[98304]{0}', space=vmem, size = 0x18000, scoped, tag = 'input window, operand 1, single buffered']
    #allocation6 [shape = 's32[1]{0}', space=sflag, size = 0x4, scoped, tag = 'scoped memory for tpu_custom_call.1']
    #allocation7 [shape = 'u8[4096]{0}', space=vmem, size = 0x1000, scoped, tag = 'output window, operand 0, single buffered']
    %7 = vsyncpa [#allocation3], 0
    %8 = vsyncpa [#allocation6], 0
    %9 = vsyncpa [#allocation4], 0
    // Predicated region
    $region2: #{tpu_custom_call.1} parent=1 // pred_check
      _
    $region3: #{tpu_custom_call.1} parent=1 // pred_check_branch
      %11 = sbr.rel (0) target = $region5
    $region4: #{tpu_custom_call.1} parent=1 // pred_region
      %s13 = ssub.s32 512, 512
      %14 = vsyncadd [#allocation3], %s13
      %s15 = sshll.u32 [#allocation2], 4
      %s16 = int_to_ptr.vmem [resolvable:$true] %s15
      %21 = dma.hbm_to_vmem [thread:$0]  %s0, 512, %s16, [#allocation3], 128, 128, 8
    $region5: #{tpu_custom_call.1} parent=1 // pred_fallthru
      _
    // Predicated region
    $region6: #{tpu_custom_call.1} parent=1 // pred_check
      _
    $region7: #{tpu_custom_call.1} parent=1 // pred_check_branch
      %23 = sbr.rel (0) target = $region9
    $region8: #{tpu_custom_call.1} parent=1 // pred_region
      %s25 = ssub.s32 3072, 3072
      %26 = vsyncadd [#allocation6], %s25
      %s27 = sshll.u32 [#allocation5], 4
      %s28 = int_to_ptr.vmem [resolvable:$true] %s27
      %33 = dma.hbm_to_vmem [thread:$0]  %s1, 3072, %s28, [#allocation6], 128, 128, 8
    $region9: #{tpu_custom_call.1} parent=1 // pred_fallthru
      _
    // Predicated region
    $region10: #{tpu_custom_call.1} parent=1 // pred_check
      _
    $region11: #{tpu_custom_call.1} parent=1 // pred_check_branch
      %35 = sbr.rel (0) target = $region13
    $region12: #{tpu_custom_call.1} parent=1 // pred_region
      %36 = dma.done [#allocation3], 512
    $region13: #{tpu_custom_call.1} parent=1 // pred_fallthru
      _
    // Predicated region
    $region14: #{tpu_custom_call.1} parent=1 // pred_check
      _
    $region15: #{tpu_custom_call.1} parent=1 // pred_check_branch
      %38 = sbr.rel (0) target = $region17
    $region16: #{tpu_custom_call.1} parent=1 // pred_region
      %39 = dma.done [#allocation6], 3072
    $region17: #{tpu_custom_call.1} parent=1 // pred_fallthru
      _
    %v40 = vld [vmem:[#allocation2] sm:$0xff]
    %v41 = vld [vmem:[#allocation2 + $0x8] sm:$0xff]
    %v42 = vld [vmem:[#allocation2 + $0x10] sm:$0xff]
    %v43 = vld [vmem:[#allocation2 + $0x18] sm:$0xff]
    %v44 = vld [vmem:[#allocation5] sm:$0xff]
    %v45 = vld [vmem:[#allocation5 + $0x8] sm:$0xff]
    %v46 = vld [vmem:[#allocation5 + $0x10] sm:$0xff]
    %v47 = vld [vmem:[#allocation5 + $0x18] sm:$0xff]
    %v48 = vmul.f32 %v44, %v40
    %v49 = vmul.f32 %v45, %v41
    %v50 = vmul.f32 %v46, %v42
    %v51 = vmul.f32 %v47, %v43
    %v52 = vadd.f32 %v48, %v49
    %v53 = vadd.f32 %v52, %v50
    %v54 = vadd.f32 %v53, %v51
    %v55 = vrot.slane %v54, 4
    %v56 = vadd.f32 %v54, %v55
    %v57 = vrot.slane %v56, 2
    %v58 = vadd.f32 %v56, %v57
    %v59 = vrot.slane %v58, 1
    %v60 = vadd.f32 %v58, %v59
    %s61 = scalar_lea.vmem [#allocation5], 32
    %v62 = vld [vmem:[%s61] sm:$0xff]
    %v63 = vld [vmem:[%s61 + $0x8] sm:$0xff]
    %v64 = vld [vmem:[%s61 + $0x10] sm:$0xff]
    %v65 = vld [vmem:[%s61 + $0x18] sm:$0xff]
    %v66 = vmul.f32 %v62, %v40
    %v67 = vmul.f32 %v63, %v41
    %v68 = vmul.f32 %v64, %v42
    %v69 = vmul.f32 %v65, %v43
    %v70 = vadd.f32 %v66, %v67
    %v71 = vadd.f32 %v70, %v68
    %v72 = vadd.f32 %v71, %v69
    %v73 = vrot.slane %v72, 4
    %v74 = vadd.f32 %v72, %v73
    %v75 = vrot.slane %v74, 2
    %v76 = vadd.f32 %v74, %v75
    %v77 = vrot.slane %v76, 1
    %v78 = vadd.f32 %v76, %v77
    %s79 = scalar_lea.vmem [#allocation5], 64
    %v80 = vld [vmem:[%s79] sm:$0xff]
    %v81 = vld [vmem:[%s79 + $0x8] sm:$0xff]
    %v82 = vld [vmem:[%s79 + $0x10] sm:$0xff]
    %v83 = vld [vmem:[%s79 + $0x18] sm:$0xff]
    %v84 = vmul.f32 %v80, %v40
    %v85 = vmul.f32 %v81, %v41
    %v86 = vmul.f32 %v82, %v42
    %v87 = vmul.f32 %v83, %v43
    %v88 = vadd.f32 %v84, %v85
    %v89 = vadd.f32 %v88, %v86
    %v90 = vadd.f32 %v89, %v87
    %v91 = vrot.slane %v90, 4
    %v92 = vadd.f32 %v90, %v91
    %v93 = vrot.slane %v92, 2
    %v94 = vadd.f32 %v92, %v93
    %v95 = vrot.slane %v94, 1
    %v96 = vadd.f32 %v94, %v95
    %s97 = scalar_lea.vmem [#allocation5], 96
    %v98 = vld [vmem:[%s97] sm:$0xff]
    %v99 = vld [vmem:[%s97 + $0x8] sm:$0xff]
    %v100 = vld [vmem:[%s97 + $0x10] sm:$0xff]
    %v101 = vld [vmem:[%s97 + $0x18] sm:$0xff]
    %v102 = vmul.f32 %v98, %v40
    %v103 = vmul.f32 %v99, %v41
    %v104 = vmul.f32 %v100, %v42
    %v105 = vmul.f32 %v101, %v43
    %v106 = vadd.f32 %v102, %v103
    %v107 = vadd.f32 %v106, %v104
    %v108 = vadd.f32 %v107, %v105
    %v109 = vrot.slane %v108, 4
    %v110 = vadd.f32 %v108, %v109
    %v111 = vrot.slane %v110, 2
    %v112 = vadd.f32 %v110, %v111
    %v113 = vrot.slane %v112, 1
    %v114 = vadd.f32 %v112, %v113
    %s115 = scalar_lea.vmem [#allocation5], 128
    %v116 = vld [vmem:[%s115] sm:$0xff]
    %v117 = vld [vmem:[%s115 + $0x8] sm:$0xff]
    %v118 = vld [vmem:[%s115 + $0x10] sm:$0xff]
    %v119 = vld [vmem:[%s115 + $0x18] sm:$0xff]
    %v120 = vmul.f32 %v116, %v40
    %v121 = vmul.f32 %v117, %v41
    %v122 = vmul.f32 %v118, %v42
    %v123 = vmul.f32 %v119, %v43
    %v124 = vadd.f32 %v120, %v121
    %v125 = vadd.f32 %v124, %v122
    %v126 = vadd.f32 %v125, %v123
    %v127 = vrot.slane %v126, 4
    %v128 = vadd.f32 %v126, %v127
    %v129 = vrot.slane %v128, 2
    %v130 = vadd.f32 %v128, %v129
    %v131 = vrot.slane %v130, 1
    %v132 = vadd.f32 %v130, %v131
    %s133 = scalar_lea.vmem [#allocation5], 160
    %v134 = vld [vmem:[%s133] sm:$0xff]
    %v135 = vld [vmem:[%s133 + $0x8] sm:$0xff]
    %v136 = vld [vmem:[%s133 + $0x10] sm:$0xff]
    %v137 = vld [vmem:[%s133 + $0x18] sm:$0xff]
    %v138 = vmul.f32 %v134, %v40
    %v139 = vmul.f32 %v135, %v41
    %v140 = vmul.f32 %v136, %v42
    %v141 = vmul.f32 %v137, %v43
    %v142 = vadd.f32 %v138, %v139
    %v143 = vadd.f32 %v142, %v140
    %v144 = vadd.f32 %v143, %v141
    %v145 = vrot.slane %v144, 4
    %v146 = vadd.f32 %v144, %v145
    %v147 = vrot.slane %v146, 2
    %v148 = vadd.f32 %v146, %v147
    %v149 = vrot.slane %v148, 1
    %v150 = vadd.f32 %v148, %v149
    %vm151 = vcmask 1040384
    %v152 = vsel %vm151, %v60, %v78
    %vm153 = vcmask 1041408
    %v154 = vsel %vm153, %v152, %v96
    %vm155 = vcmask 1042432
    %v156 = vsel %vm155, %v154, %v114
    %vm157 = vcmask 1043456
    %v158 = vsel %vm157, %v156, %v132
    %vm159 = vcmask 1044480
    %v160 = vsel %vm159, %v158, %v150
    %v161 = vmax.f32 %v160, -10.0
    %v162 = vmin.f32 %v161, 10.0
    %v163 = vmul.f32 %v162, 1.442695
    %v164 = vpow.pop %v163
    %v165 = vadd.f32 %v164, 1.0
    %v166 = vlog2.pop %v165
    %v167 = vmul.f32 %v166, 0.6931472
    %v168 = vmul.f32 -0.5, %v164
    %v169 = vadd.f32 %v168, 1.0
    %v170 = vmul.f32 %v169, %v164
    %v171 = vand.u32 2147483647, %v164
    %vm172 = vcmp.lt.f32.partialorder %v171, 0.0004427343
    %v173 = vsel %vm172, %v170, %v167
    %p174 = scmp.ne.s32.totalorder 0, 0
    // Predicated region
    $region18: #{tpu_custom_call.1} parent=1 // pred_check
      %p175 = pneg %p174
    $region19: #{tpu_custom_call.1} parent=1 // pred_check_branch
      %177 = sbr.rel (%p175) target = $region21
    $region20: #{tpu_custom_call.1} parent=1 // pred_region
      %vm178 = vcmask 1045504
      %v179 = vsel %vm178, %v173, 0.0
      %180 = vadd.xlane.f32.xlu0 %v179
      %v181 = vpop.xlane.xlu0 %180
      %v182 = vrot.slane %v181, 4
      %v183 = vadd.f32 %v181, %v182
      %v184 = vrot.slane %v183, 2
      %v185 = vadd.f32 %v183, %v184
      %v186 = vrot.slane %v185, 1
      %v187 = vadd.f32 %v185, %v186
      %s188 = vtos %v187
      %v189 = vstv %s188
      %190 = vst [vmem:[#allocation7] sm:$0xff] %v189
    $region21: #{tpu_custom_call.1} parent=1 // pred_fallthru
      _
    %p191 = scmp.eq.s32.totalorder 0, 0
    // Predicated region
    $region22: #{tpu_custom_call.1} parent=1 // pred_check
      %p192 = pneg %p191
    $region23: #{tpu_custom_call.1} parent=1 // pred_check_branch
      %194 = sbr.rel (%p192) target = $region25
    $region24: #{tpu_custom_call.1} parent=1 // pred_region
      %v195 = vlaneseq
      %v196 = vand.u32 %v195, 127
      %vm197 = vcmp.lt.s32.totalorder %v196, 8
      %v198 = vsel %vm197, %v173, 0.0
      %vm199 = vcmask 1045504
      %v200 = vsel %vm199, %v198, 0.0
      %201 = vadd.xlane.f32.xlu0 %v200
      %v202 = vpop.xlane.xlu0 %201
      %v203 = vrot.slane %v202, 4
      %v204 = vadd.f32 %v202, %v203
      %v205 = vrot.slane %v204, 2
      %v206 = vadd.f32 %v204, %v205
      %v207 = vrot.slane %v206, 1
      %v208 = vadd.f32 %v206, %v207
      %s209 = vtos %v208
      %v210 = vstv %s209
      %211 = vst [vmem:[#allocation7] sm:$0xff] %v210
    $region25: #{tpu_custom_call.1} parent=1 // pred_fallthru
      _
    // Predicated region
    $region26: #{tpu_custom_call.1} parent=1 // pred_check
      _
    $region27: #{tpu_custom_call.1} parent=1 // pred_check_branch
      %213 = sbr.rel (0) target = $region29
    $region28: #{tpu_custom_call.1} parent=1 // pred_region
      %s215 = ssub.s32 128, 128
      %216 = vsyncadd [#allocation4], %s215
      %s218 = sshll.u32 [#allocation7], 4
      %s219 = int_to_ptr.vmem [resolvable:$true] %s218
      %221 = dma.vmem_to_hbm [thread:$0]  %s219, 128, %s2, [#allocation4]
    $region29: #{tpu_custom_call.1} parent=1 // pred_fallthru
      _
    // Predicated region
    $region30: #{tpu_custom_call.1} parent=1 // pred_check
      _
    $region31: #{tpu_custom_call.1} parent=1 // pred_check_branch
      %223 = sbr.rel (0) target = $region33
    $region32: #{tpu_custom_call.1} parent=1 // pred_region
      %224 = dma.done [#allocation4], 128
    $region33: #{tpu_custom_call.1} parent=1 // pred_fallthru
      _
    %225 = vsyncpa [#allocation3], 1
    %226 = vsyncpa [#allocation6], 1
    %227 = vsyncpa [#allocation4], 1

</llo_original>
